<compile_context>
chip_gen: v5e
topology: v5e:2x2
jax: 0.10.0
libtpu: 0.0.40
codegen_flags: <defaults>
</compile_context>

<pallas_src>
import functools

import jax
import jax.numpy as jnp
from jax.experimental import pallas as pl
from jax.experimental.pallas import tpu as pltpu

DSENSORY = 8                      # (pitch, roll, spd, vspd, e_pitch, e_roll, e_spd, e_vspd)
LAYER_DIMS = [DSENSORY, 16, 32, 64, 32, 16, 3]
NUM_LAYERS = len(LAYER_DIMS) - 1
BN_EPS = 1e-5

LANE = 128
MAX_TILE_B = 16384                # rows (lanes) per grid step at large batch


def _round_up(x, m):
    return ((x + m - 1) // m) * m


# Transposed packing: slab rows hold W^T (dout rows per layer); the head's 3
# output rows are padded to 8 so every block/slice stays 8-sublane aligned.
DOUT_PAD = [_round_up(d, 8) for d in LAYER_DIMS[1:]]          # [16,32,64,32,16,8]
_ROW_OFFSETS = []
_off = 0
for _d in DOUT_PAD:
    _ROW_OFFSETS.append(_off)
    _off += _d
SLAB_ROWS = _off                                              # 168 (mult of 8)
W_COLS = max(LAYER_DIMS[:-1])                                 # 64 (max din)


def _mlp_kernel(x_ref, w_ref, b_ref, o_ref):
    """Fused forward for one batch tile, batch on lanes.

    x_ref: (8, TILE_B) bf16       w_ref: (168, 64) bf16 (W^T slabs, BN folded)
    b_ref: (168, 1)  f32          o_ref: (8, TILE_B) f32 (rows 0..2 valid)
    """
    h = x_ref[...]                                            # (8, TILE_B) bf16
    for li in range(NUM_LAYERS):
        din = LAYER_DIMS[li]
        rows = DOUT_PAD[li]
        off = _ROW_OFFSETS[li]
        # Static, 8-row / 0-lane aligned slices of the resident slabs.
        w_t = w_ref[off:off + rows, :din]                     # (rows, din) bf16
        b = b_ref[off:off + rows, :]                          # (rows, 1)  f32
        # z^T = W^T @ h^T ; MXU matmul, f32 accumulation; lane-broadcast bias.
        z = jnp.dot(w_t, h, preferred_element_type=jnp.float32) + b
        if li < NUM_LAYERS - 1:
            h = jnp.maximum(z, 0.0).astype(jnp.bfloat16)      # ReLU -> next layer
        else:
            # Exact sigmoid head (lane-dense; cost negligible).
            o_ref[...] = 1.0 / (1.0 + jnp.exp(-z))


def init_params(key):
    """Deterministic synthetic parameters with the same shapes as the PyTorch module."""
    params = {}
    keys = jax.random.split(key, 6 * 6)
    ki = 0
    for li in range(NUM_LAYERS):
        din, dout = LAYER_DIMS[li], LAYER_DIMS[li + 1]
        params[f"w{li+1}"] = (jax.random.normal(keys[ki], (din, dout), jnp.float32)
                              * (1.0 / jnp.sqrt(din))); ki += 1
        params[f"b{li+1}"] = jax.random.normal(keys[ki], (1, dout), jnp.float32) * 0.1; ki += 1
        if li < NUM_LAYERS - 1:  # BatchNorm after fc1..fc5 only
            params[f"gamma{li+1}"] = 1.0 + 0.1 * jax.random.normal(keys[ki], (1, dout), jnp.float32); ki += 1
            params[f"beta{li+1}"] = 0.1 * jax.random.normal(keys[ki], (1, dout), jnp.float32); ki += 1
            params[f"mean{li+1}"] = 0.1 * jax.random.normal(keys[ki], (1, dout), jnp.float32); ki += 1
            params[f"var{li+1}"] = jnp.abs(jax.random.normal(keys[ki], (1, dout), jnp.float32)) + 0.5; ki += 1
    return params


def _pack_params(params):
    """Fold eval-mode BN into W/b (exact), transpose, and pack into two slabs.

    Returns (w_slab bf16 (168, 64) holding W^T per layer, b_slab f32 (168, 1)).
    """
    w_slab = jnp.zeros((SLAB_ROWS, W_COLS), jnp.float32)
    b_slab = jnp.zeros((SLAB_ROWS, 1), jnp.float32)
    for li in range(NUM_LAYERS):
        din, dout = LAYER_DIMS[li], LAYER_DIMS[li + 1]
        w = params[f"w{li+1}"]                                               # (din, dout)
        b = params[f"b{li+1}"]                                               # (1, dout)
        if li < NUM_LAYERS - 1:
            s = params[f"gamma{li+1}"] / jnp.sqrt(params[f"var{li+1}"] + BN_EPS)
            w = w * s                                                        # W' = W * scale
            b = (b - params[f"mean{li+1}"]) * s + params[f"beta{li+1}"]      # b' folded
        off = _ROW_OFFSETS[li]
        w_slab = w_slab.at[off:off + dout, :din].set(w.T)
        b_slab = b_slab.at[off:off + dout, :].set(b.T)
    return w_slab.astype(jnp.bfloat16), b_slab


@functools.partial(jax.jit, static_argnames=("tile_b",))
def mlp_v2_forward(x, params, *, tile_b=None):
    batch = x.shape[0]

    if tile_b is None:
        padded128 = _round_up(max(batch, 1), LANE)
        n_tiles = max(1, -(-padded128 // MAX_TILE_B))
        # Ensure >=2 grid steps when the batch allows it (v7x megacore split).
        if n_tiles == 1 and padded128 >= 2 * LANE:
            n_tiles = 2
        tile_b = _round_up(-(-padded128 // n_tiles), LANE)    # balanced tiles
    tile_b = max(LANE, _round_up(int(tile_b), LANE))
    padded = _round_up(batch, tile_b)

    # Batch-on-lanes layout: (features, batch); stream input as bf16.
    xt = jnp.pad(x, ((0, padded - batch), (0, 0))).T.astype(jnp.bfloat16)

    w_slab, b_slab = _pack_params(params)
    grid = (padded // tile_b,)

    out_t = pl.pallas_call(
        _mlp_kernel,
        out_shape=jax.ShapeDtypeStruct((DOUT_PAD[-1], padded), jnp.float32),
        grid=grid,
        in_specs=[
            pl.BlockSpec((DSENSORY, tile_b), lambda i: (0, i)),     # streamed batch tile
            pl.BlockSpec((SLAB_ROWS, W_COLS), lambda i: (0, 0)),    # W^T slab, resident
            pl.BlockSpec((SLAB_ROWS, 1), lambda i: (0, 0)),         # bias slab, resident
        ],
        out_specs=pl.BlockSpec((DOUT_PAD[-1], tile_b), lambda i: (0, i)),   # lane-dense store
        compiler_params=pltpu.CompilerParams(
            dimension_semantics=("parallel",),        # megacore split on v7x; no-op v5e/v6e
            vmem_limit_bytes=48 * 1024 * 1024,        # safe for v7x's 64 MiB/TC
        ),
    )(xt, w_slab, b_slab)

    # Rows 0..2 are the real head outputs (3 padded to 8 for alignment).
    return out_t[:LAYER_DIMS[-1], :batch].T


def mlp_v2_reference(x, params):
    """Pure-JAX f32 reference (eval-mode BatchNorm) for a sanity check."""
    h = x
    for li in range(1, NUM_LAYERS):
        z = h @ params[f"w{li}"] + params[f"b{li}"]
        z = (params[f"gamma{li}"] * (z - params[f"mean{li}"])
             / jnp.sqrt(params[f"var{li}"] + BN_EPS) + params[f"beta{li}"])
        h = jnp.maximum(z, 0.0)
    z = h @ params[f"w{NUM_LAYERS}"] + params[f"b{NUM_LAYERS}"]
    return jax.nn.sigmoid(z)


if __name__ == "__main__":
    key = jax.random.PRNGKey(0)
    k_params, k_x = jax.random.split(key)
    params = init_params(k_params)

    # Small single-tile run (batch padded to one 128-lane tile inside).
    x1 = jax.random.normal(k_x, (8, DSENSORY), jnp.float32)
    out1 = jax.block_until_ready(mlp_v2_forward(x1, params))
    ref1 = mlp_v2_reference(x1, params)
    assert out1.shape == (8, 3), out1.shape
    # bf16 matmul inputs chained through 6 layers -> loosened tolerance vs f32 reference.
    assert jnp.allclose(out1, ref1, atol=3e-2, rtol=0.0), float(jnp.max(jnp.abs(out1 - ref1)))

    # Multi-step grid + batch padding (batch=300 not a multiple of tile_b=128).
    x2 = jax.random.normal(jax.random.PRNGKey(1), (300, DSENSORY), jnp.float32)
    out2 = jax.block_until_ready(mlp_v2_forward(x2, params, tile_b=128))
    ref2 = mlp_v2_reference(x2, params)
    assert out2.shape == (300, 3), out2.shape
    assert jnp.allclose(out2, ref2, atol=3e-2, rtol=0.0), float(jnp.max(jnp.abs(out2 - ref2)))

    # Auto tile selection path (forces >=2 balanced tiles for megacore).
    x3 = jax.random.normal(jax.random.PRNGKey(2), (260, DSENSORY), jnp.float32)
    out3 = jax.block_until_ready(mlp_v2_forward(x3, params))
    ref3 = mlp_v2_reference(x3, params)
    assert out3.shape == (260, 3), out3.shape
    assert jnp.allclose(out3, ref3, atol=3e-2, rtol=0.0), float(jnp.max(jnp.abs(out3 - ref3)))

    print("KERNEL_OK")
</pallas_src>

<mosaic_0001>
module attributes {stable_mosaic.version = 11 : i64} {
  func.func @_mlp_kernel(%arg0: i32, %arg1: memref<8x128xbf16, #tpu.memory_space<vmem>>, %arg2: memref<168x64xbf16, #tpu.memory_space<vmem>>, %arg3: memref<168x1xf32, #tpu.memory_space<vmem>>, %arg4: memref<8x128xf32, #tpu.memory_space<vmem>>) attributes {dimension_semantics = [#tpu.dimension_semantics<parallel>], iteration_bounds = array<i64: 1>, scalar_prefetch = 0 : i64, scratch_operands = 0 : i64, tpu.core_type = #tpu.core_type<tc>, window_params = [{transform_indices = @transform_0, window_bounds = array<i64: 8, 128>}, {pipeline_mode = #tpu.pipeline_mode<synchronous>, transform_indices = @transform_1, window_bounds = array<i64: 168, 64>}, {pipeline_mode = #tpu.pipeline_mode<synchronous>, transform_indices = @transform_2, window_bounds = array<i64: 168, 1>}, {transform_indices = @transform_3, window_bounds = array<i64: 8, 128>}]} {
    %c0 = arith.constant 0 : index
    %c0_0 = arith.constant 0 : index
    %0 = vector.load %arg1[%c0, %c0_0] : memref<8x128xbf16, #tpu.memory_space<vmem>>, vector<8x128xbf16>
    %c0_1 = arith.constant 0 : index
    %c0_2 = arith.constant 0 : index
    %1 = vector.load %arg2[%c0_1, %c0_2] : memref<168x64xbf16, #tpu.memory_space<vmem>>, vector<16x8xbf16>
    %c0_3 = arith.constant 0 : index
    %c0_4 = arith.constant 0 : index
    %2 = vector.load %arg3[%c0_3, %c0_4] : memref<168x1xf32, #tpu.memory_space<vmem>>, vector<16x1xf32>
    %cst = arith.constant dense<0.000000e+00> : vector<16x128xf32>
    %3 = tpu.matmul %1, %0, %cst {dimension_numbers = #tpu.dot_dimension_numbers<[1], [0], [0], [1], [0, 0, 1, 1], [], []>} : vector<16x8xbf16>, vector<8x128xbf16>, vector<16x128xf32> -> vector<16x128xf32>
    %4 = vector.broadcast %2 : vector<16x1xf32> to vector<16x128xf32>
    %5 = arith.addf %3, %4 : vector<16x128xf32>
    %cst_5 = arith.constant 0.000000e+00 : f32
    %6 = vector.broadcast %cst_5 : f32 to vector<16x128xf32>
    %7 = arith.maximumf %5, %6 : vector<16x128xf32>
    %8 = arith.truncf %7 : vector<16x128xf32> to vector<16x128xbf16>
    %c16 = arith.constant 16 : index
    %c0_6 = arith.constant 0 : index
    %9 = vector.load %arg2[%c16, %c0_6] : memref<168x64xbf16, #tpu.memory_space<vmem>>, vector<32x16xbf16>
    %c16_7 = arith.constant 16 : index
    %c0_8 = arith.constant 0 : index
    %10 = vector.load %arg3[%c16_7, %c0_8] : memref<168x1xf32, #tpu.memory_space<vmem>>, vector<32x1xf32>
    %cst_9 = arith.constant dense<0.000000e+00> : vector<32x128xf32>
    %11 = tpu.matmul %9, %8, %cst_9 {dimension_numbers = #tpu.dot_dimension_numbers<[1], [0], [0], [1], [0, 0, 1, 1], [], []>} : vector<32x16xbf16>, vector<16x128xbf16>, vector<32x128xf32> -> vector<32x128xf32>
    %12 = vector.broadcast %10 : vector<32x1xf32> to vector<32x128xf32>
    %13 = arith.addf %11, %12 : vector<32x128xf32>
    %cst_10 = arith.constant 0.000000e+00 : f32
    %14 = vector.broadcast %cst_10 : f32 to vector<32x128xf32>
    %15 = arith.maximumf %13, %14 : vector<32x128xf32>
    %16 = arith.truncf %15 : vector<32x128xf32> to vector<32x128xbf16>
    %c48 = arith.constant 48 : index
    %c0_11 = arith.constant 0 : index
    %17 = vector.load %arg2[%c48, %c0_11] : memref<168x64xbf16, #tpu.memory_space<vmem>>, vector<64x32xbf16>
    %c48_12 = arith.constant 48 : index
    %c0_13 = arith.constant 0 : index
    %18 = vector.load %arg3[%c48_12, %c0_13] : memref<168x1xf32, #tpu.memory_space<vmem>>, vector<64x1xf32>
    %cst_14 = arith.constant dense<0.000000e+00> : vector<64x128xf32>
    %19 = tpu.matmul %17, %16, %cst_14 {dimension_numbers = #tpu.dot_dimension_numbers<[1], [0], [0], [1], [0, 0, 1, 1], [], []>} : vector<64x32xbf16>, vector<32x128xbf16>, vector<64x128xf32> -> vector<64x128xf32>
    %20 = vector.broadcast %18 : vector<64x1xf32> to vector<64x128xf32>
    %21 = arith.addf %19, %20 : vector<64x128xf32>
    %cst_15 = arith.constant 0.000000e+00 : f32
    %22 = vector.broadcast %cst_15 : f32 to vector<64x128xf32>
    %23 = arith.maximumf %21, %22 : vector<64x128xf32>
    %24 = arith.truncf %23 : vector<64x128xf32> to vector<64x128xbf16>
    %c112 = arith.constant 112 : index
    %c0_16 = arith.constant 0 : index
    %25 = vector.load %arg2[%c112, %c0_16] : memref<168x64xbf16, #tpu.memory_space<vmem>>, vector<32x64xbf16>
    %c112_17 = arith.constant 112 : index
    %c0_18 = arith.constant 0 : index
    %26 = vector.load %arg3[%c112_17, %c0_18] : memref<168x1xf32, #tpu.memory_space<vmem>>, vector<32x1xf32>
    %cst_19 = arith.constant dense<0.000000e+00> : vector<32x128xf32>
    %27 = tpu.matmul %25, %24, %cst_19 {dimension_numbers = #tpu.dot_dimension_numbers<[1], [0], [0], [1], [0, 0, 1, 1], [], []>} : vector<32x64xbf16>, vector<64x128xbf16>, vector<32x128xf32> -> vector<32x128xf32>
    %28 = vector.broadcast %26 : vector<32x1xf32> to vector<32x128xf32>
    %29 = arith.addf %27, %28 : vector<32x128xf32>
    %cst_20 = arith.constant 0.000000e+00 : f32
    %30 = vector.broadcast %cst_20 : f32 to vector<32x128xf32>
    %31 = arith.maximumf %29, %30 : vector<32x128xf32>
    %32 = arith.truncf %31 : vector<32x128xf32> to vector<32x128xbf16>
    %c144 = arith.constant 144 : index
    %c0_21 = arith.constant 0 : index
    %33 = vector.load %arg2[%c144, %c0_21] : memref<168x64xbf16, #tpu.memory_space<vmem>>, vector<16x32xbf16>
    %c144_22 = arith.constant 144 : index
    %c0_23 = arith.constant 0 : index
    %34 = vector.load %arg3[%c144_22, %c0_23] : memref<168x1xf32, #tpu.memory_space<vmem>>, vector<16x1xf32>
    %cst_24 = arith.constant dense<0.000000e+00> : vector<16x128xf32>
    %35 = tpu.matmul %33, %32, %cst_24 {dimension_numbers = #tpu.dot_dimension_numbers<[1], [0], [0], [1], [0, 0, 1, 1], [], []>} : vector<16x32xbf16>, vector<32x128xbf16>, vector<16x128xf32> -> vector<16x128xf32>
    %36 = vector.broadcast %34 : vector<16x1xf32> to vector<16x128xf32>
    %37 = arith.addf %35, %36 : vector<16x128xf32>
    %cst_25 = arith.constant 0.000000e+00 : f32
    %38 = vector.broadcast %cst_25 : f32 to vector<16x128xf32>
    %39 = arith.maximumf %37, %38 : vector<16x128xf32>
    %40 = arith.truncf %39 : vector<16x128xf32> to vector<16x128xbf16>
    %c160 = arith.constant 160 : index
    %c0_26 = arith.constant 0 : index
    %41 = vector.load %arg2[%c160, %c0_26] : memref<168x64xbf16, #tpu.memory_space<vmem>>, vector<8x16xbf16>
    %c160_27 = arith.constant 160 : index
    %c0_28 = arith.constant 0 : index
    %42 = vector.load %arg3[%c160_27, %c0_28] : memref<168x1xf32, #tpu.memory_space<vmem>>, vector<8x1xf32>
    %cst_29 = arith.constant dense<0.000000e+00> : vector<8x128xf32>
    %43 = tpu.matmul %41, %40, %cst_29 {dimension_numbers = #tpu.dot_dimension_numbers<[1], [0], [0], [1], [0, 0, 1, 1], [], []>} : vector<8x16xbf16>, vector<16x128xbf16>, vector<8x128xf32> -> vector<8x128xf32>
    %44 = vector.broadcast %42 : vector<8x1xf32> to vector<8x128xf32>
    %45 = arith.addf %43, %44 : vector<8x128xf32>
    %cst_30 = arith.constant 0.000000e+00 : f32
    %46 = vector.broadcast %cst_30 : f32 to vector<8x128xf32>
    %47 = arith.subf %46, %45 : vector<8x128xf32>
    %48 = math.exp %47 : vector<8x128xf32>
    %cst_31 = arith.constant 1.000000e+00 : f32
    %49 = vector.broadcast %cst_31 : f32 to vector<8x128xf32>
    %50 = arith.addf %49, %48 : vector<8x128xf32>
    %cst_32 = arith.constant 1.000000e+00 : f32
    %51 = vector.broadcast %cst_32 : f32 to vector<8x128xf32>
    %52 = arith.divf %51, %50 : vector<8x128xf32>
    %c0_33 = arith.constant 0 : index
    %c0_34 = arith.constant 0 : index
    %53 = vector.load %arg4[%c0_33, %c0_34] : memref<8x128xf32, #tpu.memory_space<vmem>>, vector<8x128xf32>
    tpu.vector_store %arg4[%c0_33, %c0_34], %52 {strides = array<i32>} : memref<8x128xf32, #tpu.memory_space<vmem>>, vector<8x128xf32>,
    return
  }
  func.func @transform_0(%arg0: i32) -> (i32, i32) {
    %c0_i32 = arith.constant 0 : i32
    %c0_i32_0 = arith.constant 0 : i32
    return %c0_i32, %arg0 : i32, i32
  }
  func.func @transform_1(%arg0: i32) -> (i32, i32) {
    %c0_i32 = arith.constant 0 : i32
    %c0_i32_0 = arith.constant 0 : i32
    %c0_i32_1 = arith.constant 0 : i32
    return %c0_i32, %c0_i32_0 : i32, i32
  }
  func.func @transform_2(%arg0: i32) -> (i32, i32) {
    %c0_i32 = arith.constant 0 : i32
    %c0_i32_0 = arith.constant 0 : i32
    %c0_i32_1 = arith.constant 0 : i32
    return %c0_i32, %c0_i32_0 : i32, i32
  }
  func.func @transform_3(%arg0: i32) -> (i32, i32) {
    %c0_i32 = arith.constant 0 : i32
    %c0_i32_0 = arith.constant 0 : i32
    return %c0_i32, %arg0 : i32, i32
  }
}

</mosaic_0001>

<llo_original>
// kernel: mlp_v2_forward.1
$region0: #{mlp_v2_forward.1}
  #allocation0 [shape = 'u32[]', space=smem, size = 0x4, offset = 0x4, fixed_abs, tag = 'smem constant byte address 0x4 - core index']
  #allocation1 [shape = 'u32[72,128]{1,0:T(1,128)}', space=vmem, size = 0x9000, scoped, tag = 'internal scratch']
  %s0 = inlined_call_operand.vmem [shape: bf16[8,128], index: 0, kind: input, shape index: {}]
  %s1 = inlined_call_operand.vmem [shape: bf16[168,64], index: 1, kind: input, shape index: {}]
  %s2 = inlined_call_operand.vmem [shape: f32[168,1], index: 2, kind: input, shape index: {}]
  %s3 = inlined_call_operand.vmem [shape: f32[8,128], index: 3, kind: output, shape index: {}]
  %s4 = sld [smem:[#allocation0]]
  $region22: #{mlp_v2_forward.1} parent=0
    _
  %s6 = ssub.s32 1, %s4
  %s7 = scalar_select 0, %s6, %s4
  // Predicated region
  $region2: #{mlp_v2_forward.1} parent=0 // pred_check
    _
  $region3: #{mlp_v2_forward.1} parent=0 // pred_check_branch
    %9 = sbr.rel (0) target = $region5
  $region4: #{mlp_v2_forward.1} parent=0 // pred_region
    _
  $region5: #{mlp_v2_forward.1} parent=0 // pred_fallthru
    _
  // Predicated region
  $region6: #{mlp_v2_forward.1} parent=0 // pred_check
    _
  $region7: #{mlp_v2_forward.1} parent=0 // pred_check_branch
    %11 = sbr.rel (0) target = $region9
  $region8: #{mlp_v2_forward.1} parent=0 // pred_region
    _
  $region9: #{mlp_v2_forward.1} parent=0 // pred_fallthru
    _
  // Predicated region
  $region10: #{mlp_v2_forward.1} parent=0 // pred_check
    _
  $region11: #{mlp_v2_forward.1} parent=0 // pred_check_branch
    %13 = sbr.rel (0) target = $region13
  $region12: #{mlp_v2_forward.1} parent=0 // pred_region
    _
  $region13: #{mlp_v2_forward.1} parent=0 // pred_fallthru
    _
  %v15 = vld [vmem:[%s0] sm:$0xf]
  %v16 = vld [vmem:[%s1] sm:$0xf]
  %v17 = vld [vmem:[%s1 + $0x4] sm:$0xf]
  %v18 = vld [vmem:[%s2] sm:$0xff]
  %v19 = vld [vmem:[%s2 + $0x8] sm:$0xff]
  %21 = vset.pattern.permute.xlu0 0
  %22 = vperm.xlu0 %21, %v18
  %v23 = vpop.permute.xlu0 %22
  %26 = vset.pattern.permute.xlu0 0
  %27 = vperm.xlu0 %26, %v19
  %v28 = vpop.permute.xlu0 %27
  %v32 = vunpack.c.l.b16 %v16
  %v33 = vunpack.c.l.b16 %v17
  %v34 = vpack.c.b16 %v33, %v32
  %vm35 = vcmask 64512
  %v37 = vsel %vm35, %v34, 0
  %vm39 = vcmask 1043456
  %v41 = vsel %vm39, %v15, 0
  %43 = vmatpush.bf16.msra.mxu0 0
  %44 = vmatpush.bf16.msra.mxu0 0
  %45 = vmatpush.bf16.msra.mxu0 0
  %46 = vmatpush.bf16.msra.mxu0 0
  %47 = vmatpush.bf16.msra.mxu0 0
  %48 = vmatpush.bf16.msra.mxu0 0
  %49 = vmatpush.bf16.msra.mxu0 0
  %50 = vmatpush.bf16.msra.mxu0 %v41
  %51 = vmatmul.bf16.gmra.mxu0 %v37
  %v52 = vpop.f32.mrf.mxu0
  %v53 = vadd.f32 %v23, %v52
  %v54 = vpop.f32.mrf.mxu0
  %v55 = vadd.f32 %v28, %v54
  %56 = vdwg.mxu0
  %v57 = vmax.f32 %v53, 0.0
  %v58 = vmax.f32 %v55, 0.0
  %v59 = vpack.c.bf16 %v58, %v57
  %v60 = vld [vmem:[%s1 + $0x8] sm:$0xf]
  %v61 = vld [vmem:[%s1 + $0xc] sm:$0xf]
  %v62 = vld [vmem:[%s1 + $0x10] sm:$0xf]
  %v63 = vld [vmem:[%s1 + $0x14] sm:$0xf]
  %v64 = vld [vmem:[%s2 + $0x10] sm:$0xff]
  %v65 = vld [vmem:[%s2 + $0x18] sm:$0xff]
  %v66 = vld [vmem:[%s2 + $0x20] sm:$0xff]
  %v67 = vld [vmem:[%s2 + $0x28] sm:$0xff]
  %69 = vset.pattern.permute.xlu0 0
  %70 = vperm.xlu0 %69, %v64
  %v71 = vpop.permute.xlu0 %70
  %74 = vset.pattern.permute.xlu0 0
  %75 = vperm.xlu0 %74, %v65
  %v76 = vpop.permute.xlu0 %75
  %79 = vset.pattern.permute.xlu0 0
  %80 = vperm.xlu0 %79, %v66
  %v81 = vpop.permute.xlu0 %80
  %84 = vset.pattern.permute.xlu0 0
  %85 = vperm.xlu0 %84, %v67
  %v86 = vpop.permute.xlu0 %85
  %v92 = vunpack.c.l.b16 %v60
  %v93 = vunpack.c.l.b16 %v61
  %v94 = vunpack.c.l.b16 %v62
  %v95 = vunpack.c.l.b16 %v63
  %v96 = vpack.c.b16 %v93, %v92
  %v97 = vpack.c.b16 %v95, %v94
  %vm98 = vcmask 130048
  %v100 = vsel %vm98, %v96, 0
  %v103 = vsel %vm98, %v97, 0
  %105 = vmatpush.bf16.msra.mxu0 0
  %106 = vmatpush.bf16.msra.mxu0 0
  %107 = vmatpush.bf16.msra.mxu0 0
  %108 = vmatpush.bf16.msra.mxu0 0
  %109 = vmatpush.bf16.msra.mxu0 0
  %110 = vmatpush.bf16.msra.mxu0 0
  %111 = vmatpush.bf16.msra.mxu0 0
  %112 = vmatpush.bf16.msra.mxu0 %v59
  %113 = vmatmul.bf16.gmra.mxu0 %v100
  %v114 = vpop.f32.mrf.mxu0
  %v115 = vadd.f32 %v71, %v114
  %v116 = vpop.f32.mrf.mxu0
  %v117 = vadd.f32 %v76, %v116
  %118 = vmatmul.bf16.gmra.mxu0 %v103
  %v119 = vpop.f32.mrf.mxu0
  %v120 = vadd.f32 %v81, %v119
  %v121 = vpop.f32.mrf.mxu0
  %v122 = vadd.f32 %v86, %v121
  %123 = vdwg.mxu0
  %v124 = vmax.f32 %v115, 0.0
  %v125 = vmax.f32 %v117, 0.0
  %v126 = vmax.f32 %v120, 0.0
  %v127 = vmax.f32 %v122, 0.0
  %v128 = vpack.c.bf16 %v125, %v124
  %v129 = vpack.c.bf16 %v127, %v126
  %v130 = vld [vmem:[%s1 + $0x18] sm:$0xf]
  %v131 = vld [vmem:[%s1 + $0x1c] sm:$0xf]
  %v132 = vld [vmem:[%s1 + $0x20] sm:$0xf]
  %v133 = vld [vmem:[%s1 + $0x24] sm:$0xf]
  %v134 = vld [vmem:[%s1 + $0x28] sm:$0xf]
  %v135 = vld [vmem:[%s1 + $0x2c] sm:$0xf]
  %v136 = vld [vmem:[%s1 + $0x30] sm:$0xf]
  %v137 = vld [vmem:[%s1 + $0x34] sm:$0xf]
  %v138 = vld [vmem:[%s2 + $0x30] sm:$0xff]
  %v139 = vld [vmem:[%s2 + $0x38] sm:$0xff]
  %v140 = vld [vmem:[%s2 + $0x40] sm:$0xff]
  %v141 = vld [vmem:[%s2 + $0x48] sm:$0xff]
  %v142 = vld [vmem:[%s2 + $0x50] sm:$0xff]
  %v143 = vld [vmem:[%s2 + $0x58] sm:$0xff]
  %v144 = vld [vmem:[%s2 + $0x60] sm:$0xff]
  %v145 = vld [vmem:[%s2 + $0x68] sm:$0xff]
  %147 = vset.pattern.permute.xlu0 0
  %148 = vperm.xlu0 %147, %v138
  %v149 = vpop.permute.xlu0 %148
  %152 = vset.pattern.permute.xlu0 0
  %153 = vperm.xlu0 %152, %v139
  %v154 = vpop.permute.xlu0 %153
  %157 = vset.pattern.permute.xlu0 0
  %158 = vperm.xlu0 %157, %v140
  %v159 = vpop.permute.xlu0 %158
  %162 = vset.pattern.permute.xlu0 0
  %163 = vperm.xlu0 %162, %v141
  %v164 = vpop.permute.xlu0 %163
  %167 = vset.pattern.permute.xlu0 0
  %168 = vperm.xlu0 %167, %v142
  %v169 = vpop.permute.xlu0 %168
  %172 = vset.pattern.permute.xlu0 0
  %173 = vperm.xlu0 %172, %v143
  %v174 = vpop.permute.xlu0 %173
  %177 = vset.pattern.permute.xlu0 0
  %178 = vperm.xlu0 %177, %v144
  %v179 = vpop.permute.xlu0 %178
  %182 = vset.pattern.permute.xlu0 0
  %183 = vperm.xlu0 %182, %v145
  %v184 = vpop.permute.xlu0 %183
  %v194 = vunpack.c.l.b16 %v130
  %v195 = vunpack.c.l.b16 %v131
  %v196 = vunpack.c.l.b16 %v132
  %v197 = vunpack.c.l.b16 %v133
  %v198 = vunpack.c.l.b16 %v134
  %v199 = vunpack.c.l.b16 %v135
  %v200 = vunpack.c.l.b16 %v136
  %v201 = vunpack.c.l.b16 %v137
  %v202 = vpack.c.b16 %v195, %v194
  %v203 = vpack.c.b16 %v197, %v196
  %v204 = vpack.c.b16 %v199, %v198
  %v205 = vpack.c.b16 %v201, %v200
  %vm206 = vcmask 261120
  %v208 = vsel %vm206, %v202, 0
  %v211 = vsel %vm206, %v203, 0
  %v214 = vsel %vm206, %v204, 0
  %v217 = vsel %vm206, %v205, 0
  %219 = vmatpush.bf16.msra.mxu0 0
  %220 = vmatpush.bf16.msra.mxu0 0
  %221 = vmatpush.bf16.msra.mxu0 0
  %222 = vmatpush.bf16.msra.mxu0 0
  %223 = vmatpush.bf16.msra.mxu0 0
  %224 = vmatpush.bf16.msra.mxu0 0
  %225 = vmatpush.bf16.msra.mxu0 %v129
  %226 = vmatpush.bf16.msra.mxu0 %v128
  %227 = vmatmul.bf16.gmra.mxu0 %v208
  %v228 = vpop.f32.mrf.mxu0
  %v229 = vadd.f32 %v149, %v228
  %v230 = vpop.f32.mrf.mxu0
  %v231 = vadd.f32 %v154, %v230
  %232 = vmatmul.bf16.gmra.mxu0 %v211
  %v233 = vpop.f32.mrf.mxu0
  %v234 = vadd.f32 %v159, %v233
  %v235 = vpop.f32.mrf.mxu0
  %v236 = vadd.f32 %v164, %v235
  %237 = vmatmul.bf16.gmra.mxu0 %v214
  %v238 = vpop.f32.mrf.mxu0
  %v239 = vadd.f32 %v169, %v238
  %v240 = vpop.f32.mrf.mxu0
  %v241 = vadd.f32 %v174, %v240
  %242 = vmatmul.bf16.gmra.mxu0 %v217
  %v243 = vpop.f32.mrf.mxu0
  %v244 = vadd.f32 %v179, %v243
  %v245 = vpop.f32.mrf.mxu0
  %v246 = vadd.f32 %v184, %v245
  %247 = vdwg.mxu0
  %v248 = vmax.f32 %v229, 0.0
  %v249 = vmax.f32 %v231, 0.0
  %v250 = vmax.f32 %v234, 0.0
  %v251 = vmax.f32 %v236, 0.0
  %v252 = vmax.f32 %v239, 0.0
  %v253 = vmax.f32 %v241, 0.0
  %v254 = vmax.f32 %v244, 0.0
  %v255 = vmax.f32 %v246, 0.0
  %v256 = vpack.c.bf16 %v249, %v248
  %v257 = vpack.c.bf16 %v251, %v250
  %v258 = vpack.c.bf16 %v253, %v252
  %v259 = vpack.c.bf16 %v255, %v254
  %v260 = vld [vmem:[%s1 + $0x38] sm:$0xf]
  %v261 = vld [vmem:[%s1 + $0x3c] sm:$0xf]
  %v262 = vld [vmem:[%s1 + $0x40] sm:$0xf]
  %v263 = vld [vmem:[%s1 + $0x44] sm:$0xf]
  %v264 = vld [vmem:[%s2 + $0x70] sm:$0xff]
  %v265 = vld [vmem:[%s2 + $0x78] sm:$0xff]
  %v266 = vld [vmem:[%s2 + $0x80] sm:$0xff]
  %v267 = vld [vmem:[%s2 + $0x88] sm:$0xff]
  %269 = vset.pattern.permute.xlu0 0
  %270 = vperm.xlu0 %269, %v264
  %v271 = vpop.permute.xlu0 %270
  %274 = vset.pattern.permute.xlu0 0
  %275 = vperm.xlu0 %274, %v265
  %v276 = vpop.permute.xlu0 %275
  %279 = vset.pattern.permute.xlu0 0
  %280 = vperm.xlu0 %279, %v266
  %v281 = vpop.permute.xlu0 %280
  %284 = vset.pattern.permute.xlu0 0
  %285 = vperm.xlu0 %284, %v267
  %v286 = vpop.permute.xlu0 %285
  %v292 = vunpack.c.l.b16 %v260
  %v293 = vunpack.c.l.b16 %v261
  %v294 = vunpack.c.l.b16 %v262
  %v295 = vunpack.c.l.b16 %v263
  %v296 = vpack.c.b16 %v293, %v292
  %v297 = vpack.c.b16 %v295, %v294
  %vm298 = vcmask 523264
  %v300 = vsel %vm298, %v296, 0
  %v303 = vsel %vm298, %v297, 0
  %305 = vmatpush.bf16.msra.mxu0 0
  %306 = vmatpush.bf16.msra.mxu0 0
  %307 = vmatpush.bf16.msra.mxu0 0
  %308 = vmatpush.bf16.msra.mxu0 0
  %309 = vmatpush.bf16.msra.mxu0 %v259
  %310 = vmatpush.bf16.msra.mxu0 %v258
  %311 = vmatpush.bf16.msra.mxu0 %v257
  %312 = vmatpush.bf16.msra.mxu0 %v256
  %313 = vmatmul.bf16.gmra.mxu0 %v300
  %v314 = vpop.f32.mrf.mxu0
  %v315 = vadd.f32 %v271, %v314
  %v316 = vpop.f32.mrf.mxu0
  %v317 = vadd.f32 %v276, %v316
  %318 = vmatmul.bf16.gmra.mxu0 %v303
  %v319 = vpop.f32.mrf.mxu0
  %v320 = vadd.f32 %v281, %v319
  %v321 = vpop.f32.mrf.mxu0
  %v322 = vadd.f32 %v286, %v321
  %323 = vdwg.mxu0
  %v324 = vmax.f32 %v315, 0.0
  %v325 = vmax.f32 %v317, 0.0
  %v326 = vmax.f32 %v320, 0.0
  %v327 = vmax.f32 %v322, 0.0
  %v328 = vpack.c.bf16 %v325, %v324
  %v329 = vpack.c.bf16 %v327, %v326
  %v330 = vld [vmem:[%s1 + $0x48] sm:$0xf]
  %v331 = vld [vmem:[%s1 + $0x4c] sm:$0xf]
  %v332 = vld [vmem:[%s2 + $0x90] sm:$0xff]
  %v333 = vld [vmem:[%s2 + $0x98] sm:$0xff]
  %335 = vset.pattern.permute.xlu0 0
  %336 = vperm.xlu0 %335, %v332
  %v337 = vpop.permute.xlu0 %336
  %340 = vset.pattern.permute.xlu0 0
  %341 = vperm.xlu0 %340, %v333
  %v342 = vpop.permute.xlu0 %341
  %v346 = vunpack.c.l.b16 %v330
  %v347 = vunpack.c.l.b16 %v331
  %v348 = vpack.c.b16 %v347, %v346
  %v350 = vsel %vm206, %v348, 0
  %352 = vmatpush.bf16.msra.mxu0 0
  %353 = vmatpush.bf16.msra.mxu0 0
  %354 = vmatpush.bf16.msra.mxu0 0
  %355 = vmatpush.bf16.msra.mxu0 0
  %356 = vmatpush.bf16.msra.mxu0 0
  %357 = vmatpush.bf16.msra.mxu0 0
  %358 = vmatpush.bf16.msra.mxu0 %v329
  %359 = vmatpush.bf16.msra.mxu0 %v328
  %360 = vmatmul.bf16.gmra.mxu0 %v350
  %v361 = vpop.f32.mrf.mxu0
  %v362 = vadd.f32 %v337, %v361
  %v363 = vpop.f32.mrf.mxu0
  %v364 = vadd.f32 %v342, %v363
  %365 = vdwg.mxu0
  %v366 = vmax.f32 %v362, 0.0
  %v367 = vmax.f32 %v364, 0.0
  %v368 = vpack.c.bf16 %v367, %v366
  %v369 = vld [vmem:[%s1 + $0x50] sm:$0xf]
  %v370 = vld [vmem:[%s2 + $0xa0] sm:$0xff]
  %372 = vset.pattern.permute.xlu0 0
  %373 = vperm.xlu0 %372, %v370
  %v374 = vpop.permute.xlu0 %373
  %v377 = vsel %vm98, %v369, 0
  %379 = vmatpush.bf16.msra.mxu0 0
  %380 = vmatpush.bf16.msra.mxu0 0
  %381 = vmatpush.bf16.msra.mxu0 0
  %382 = vmatpush.bf16.msra.mxu0 0
  %383 = vmatpush.bf16.msra.mxu0 0
  %384 = vmatpush.bf16.msra.mxu0 0
  %385 = vmatpush.bf16.msra.mxu0 0
  %386 = vmatpush.bf16.msra.mxu0 %v368
  %387 = vmatmul.bf16.gmra.mxu0 %v377
  %v388 = vpop.f32.mrf.mxu0
  %v389 = vadd.f32 %v374, %v388
  %v390 = vpop.f32.mrf.mxu0
  %391 = vdwg.mxu0
  %v392 = vsub.f32 0.0, %v389
  %v393 = vmul.f32 %v392, 1.442695
  %v394 = vpow.pop %v393
  %v395 = vadd.f32 %v394, 1.0
  %v396 = vrcp.pop %v395
  %v397 = vmul.f32 %v395, %v396
  %v398 = vsub.f32 1.0, %v397
  %v399 = vmul.f32 %v396, %v398
  %v400 = vadd.f32 %v396, %v399
  %vm401 = vweird.f32 %v395
  %vm402 = vweird.f32 %v396
  %vm403 = vmor %vm401, %vm402
  %v404 = vsel %vm403, %v396, %v400
  %v405 = vand.u32 2147483647, %v395
  %vm406 = vcmp.eq.f32.partialorder %v405, 8.507059e+37
  %v407 = vand.u32 %v395, 2147483648
  %v408 = vor.u32 1.1754944e-38, %v407
  %v409 = vsel %vm406, %v408, %v404
  %v410 = vmul.f32 1.0, %v409
  %411 = vst [vmem:[%s3] sm:$0xff] %v410
  // Predicated region
  $region14: #{mlp_v2_forward.1} parent=0 // pred_check
    _
  $region15: #{mlp_v2_forward.1} parent=0 // pred_check_branch
    %413 = sbr.rel (0) target = $region17
  $region16: #{mlp_v2_forward.1} parent=0 // pred_region
    _
  $region17: #{mlp_v2_forward.1} parent=0 // pred_fallthru
    _
  // Predicated region
  $region18: #{mlp_v2_forward.1} parent=0 // pred_check
    _
  $region19: #{mlp_v2_forward.1} parent=0 // pred_check_branch
    %415 = sbr.rel (0) target = $region21
  $region20: #{mlp_v2_forward.1} parent=0 // pred_region
    _
  $region21: #{mlp_v2_forward.1} parent=0 // pred_fallthru
    _

</llo_original>
